<compile_context>
chip_gen: v7x
topology: tpu7x:2x2x1
jax: 0.10.0
libtpu: 0.0.40
codegen_flags: <defaults>
</compile_context>

<pallas_src>
import math

import jax
import jax.numpy as jnp
from jax.experimental import pallas as pl
from jax.experimental.pallas import tpu as pltpu

LANE = 128


def _round_up(x, m):
    return ((x + m - 1) // m) * m


def _choose_batch_tile(B, block_b):
    """Pick (tb, B_pad) for the batch grid.

    * Small batches (<= 512 rows): a single sublane-aligned tile, minimal
      padding (the whole kernel is overhead-dominated; splitting only adds the
      ~0.35 us per-step cost).
    * Large batches: tile is a multiple of 256 (fills the 256-wide MXU on
      v6e/v7x; also full on v5e's 128-wide MXU), chosen from
      {256, 512, ..., block_b} to minimize batch over-padding (e.g. B=1025
      picks 256, not 1024), then halved if needed so the grid has >= 2 steps —
      v7x has two TensorCores and a length-1 "parallel" grid can't be sharded.
    """
    B8 = _round_up(B, 8)
    if B8 <= 512:
        return B8, B8
    cands = [t for t in (256, 512, 1024, 2048) if t <= max(256, block_b)]
    tb = min(cands, key=lambda t: (_round_up(B, t) - B, -t))
    if _round_up(B, tb) // tb < 2 and tb > 256:
        tb //= 2
    return tb, _round_up(B, tb)


def actor_kernel(x_ref, w1_ref, b1_ref, w2_ref, b2_ref, w3_ref, b3_ref,
                 out_ref, xp_ref):
    # Lane-pad the (tb, S) bf16 input tile to (tb, S_pad) inside VMEM:
    # zero the scratch, then overwrite its first S lanes.  Cheap vector stores
    # (re-done every step so it is correct under megacore grid sharding);
    # zeros are required so padded lanes contribute exactly 0 through w1's
    # zero-padded rows.
    s = x_ref.shape[1]
    xp_ref[...] = jnp.zeros_like(xp_ref)
    xp_ref[:, :s] = x_ref[...]

    # fc1 + ReLU  (bf16 MXU operands, f32 accumulate, f32 epilogue)
    h1 = jnp.dot(xp_ref[...], w1_ref[...], preferred_element_type=jnp.float32)
    h1 = jnp.maximum(h1 + b1_ref[...], 0.0)
    # fc2 + ReLU
    h2 = jnp.dot(h1.astype(jnp.bfloat16), w2_ref[...],
                 preferred_element_type=jnp.float32)
    h2 = jnp.maximum(h2 + b2_ref[...], 0.0)
    # fc3 + tanh (keep epilogue f32: v5e has no bf16 VPU/EUP)
    o = jnp.dot(h2.astype(jnp.bfloat16), w3_ref[...],
                preferred_element_type=jnp.float32)
    out_ref[...] = jnp.tanh(o + b3_ref[...])


def actor_forward(state, params, *, action_size, block_b=1024):
    """state: (B, state_size) f32.

    params hold lane-padded, pre-transposed (in_pad, out_pad) bf16 weights and
    (1, out_pad) f32 biases (see init_actor_params).  Returns (B, action_size)
    f32 in [-1, 1].
    """
    w1, b1, w2, b2, w3, b3 = (
        params["w1"], params["b1"], params["w2"],
        params["b2"], params["w3"], params["b3"],
    )
    B, S = state.shape
    S_pad, H1 = w1.shape
    H2 = w2.shape[1]
    A_pad = w3.shape[1]
    assert S <= S_pad and action_size <= A_pad

    tb, B_pad = _choose_batch_tile(B, block_b)

    # bf16 state feeds the MXU directly.  Only the batch axis is padded (and
    # only when B % tb != 0); lane padding to S_pad happens inside the kernel,
    # so there is no wrapper-side (B, 128) pad op / extra HBM round-trip.
    x = state.astype(jnp.bfloat16)
    if B_pad != B:
        x = jnp.pad(x, ((0, B_pad - B), (0, 0)))

    grid = (B_pad // tb,)

    cost = pl.CostEstimate(
        flops=2 * B_pad * (S_pad * H1 + H1 * H2 + H2 * A_pad),
        transcendentals=B_pad * A_pad,
        bytes_accessed=(S_pad * H1 + H1 * H2 + H2 * A_pad) * 2   # bf16 weights
        + (H1 + H2 + A_pad) * 4                                   # f32 biases
        + B_pad * S * 2                                           # bf16 input
        + B_pad * A_pad * 4,                                      # f32 output
    )

    out_pad = pl.pallas_call(
        actor_kernel,
        out_shape=jax.ShapeDtypeStruct((B_pad, A_pad), jnp.float32),
        grid=grid,
        in_specs=[
            # Streamed bf16 activations; last dim = full array dim (legal block).
            pl.BlockSpec((tb, S), lambda i: (i, 0)),
            # Weights/biases: constant index_map -> fetched once, VMEM-resident
            # across the whole grid (~0.6 MiB bf16).  pipeline_mode=pl.Buffered(1)
            # would shave the second (unused) pipeline buffer but is left at the
            # default for portability; VMEM is nowhere near a constraint.
            pl.BlockSpec((S_pad, H1), lambda i: (0, 0)),
            pl.BlockSpec((1, H1), lambda i: (0, 0)),
            pl.BlockSpec((H1, H2), lambda i: (0, 0)),
            pl.BlockSpec((1, H2), lambda i: (0, 0)),
            pl.BlockSpec((H2, A_pad), lambda i: (0, 0)),
            pl.BlockSpec((1, A_pad), lambda i: (0, 0)),
        ],
        # Lane-dense (128-wide) f32 output; sliced to action_size in the wrapper.
        out_specs=pl.BlockSpec((tb, A_pad), lambda i: (i, 0)),
        scratch_shapes=[pltpu.VMEM((tb, S_pad), jnp.bfloat16)],
        compiler_params=pltpu.CompilerParams(
            dimension_semantics=("parallel",)),
        cost_estimate=cost,
    )(x, w1, b1, w2, b2, w3, b3)

    return out_pad[:B, :action_size]


def init_actor_params(key, state_size, action_size, fc_units=(400, 300)):
    """Deterministic synthetic init mirroring the PyTorch module's __init__.

    NOTE: hidden_init uses lim = 1/sqrt(weight.size(0)) = 1/sqrt(out_features),
    a quirk of the reference code (not true fan_in) — kept intentionally.
    Final layer uses uniform(-3e-3, 3e-3); biases follow nn.Linear's default
    uniform(-1/sqrt(in_features), ...).

    Weights are stored transposed (in, out), zero-padded to lane multiples of
    128, and cast to bf16 (the PyTorch module is f32; bf16 weights are an
    inference-precision tradeoff).  Biases are zero-padded, f32.  Any external
    checkpoint loader must also zero-pad — padded rows/cols must be exactly 0.
    """
    dims = (state_size,) + tuple(fc_units) + (action_size,)
    params = {}
    keys = jax.random.split(key, 6)
    for i in range(3):
        inp, outp = dims[i], dims[i + 1]
        inp_pad, outp_pad = _round_up(inp, LANE), _round_up(outp, LANE)
        if i < len(fc_units):
            lim_w = 1.0 / math.sqrt(outp)  # matches reference's weight.size(0)
        else:
            lim_w = 3e-3
        lim_b = 1.0 / math.sqrt(inp)
        w = jax.random.uniform(keys[2 * i], (inp, outp), jnp.float32,
                               minval=-lim_w, maxval=lim_w)
        b = jax.random.uniform(keys[2 * i + 1], (1, outp), jnp.float32,
                               minval=-lim_b, maxval=lim_b)
        w_pad = jnp.pad(w, ((0, inp_pad - inp), (0, outp_pad - outp)))
        b_pad = jnp.pad(b, ((0, 0), (0, outp_pad - outp)))
        params[f"w{i+1}"] = w_pad.astype(jnp.bfloat16)
        params[f"b{i+1}"] = b_pad
    return params


def _actor_reference(state, params, action_size):
    """Pure-JAX reference using the same bf16 weights/inputs, f32 accumulation."""
    w1, b1 = params["w1"].astype(jnp.float32), params["b1"]
    w2, b2 = params["w2"].astype(jnp.float32), params["b2"]
    w3, b3 = params["w3"].astype(jnp.float32), params["b3"]
    S_pad = w1.shape[0]
    x = state.astype(jnp.bfloat16).astype(jnp.float32)   # match kernel numerics
    x = jnp.pad(x, ((0, 0), (0, S_pad - state.shape[1])))
    h1 = jnp.maximum(x @ w1 + b1, 0.0)
    h2 = jnp.maximum(h1 @ w2 + b2, 0.0)
    return jnp.tanh(h2 @ w3 + b3)[:, :action_size]


if __name__ == "__main__":
    key = jax.random.PRNGKey(0)
    k_params, k_state, k_state2 = jax.random.split(key, 3)

    state_size = 24      # e.g. Tennis env observation size
    action_size = 2
    batch = 8            # small harness batch -> single grid step

    params = init_actor_params(k_params, state_size, action_size, fc_units=(400, 300))

    # Case 1: tiny batch (single tile).
    state = jax.random.normal(k_state, (batch, state_size), dtype=jnp.float32)
    actions = jax.block_until_ready(actor_forward(state, params, action_size=action_size))
    assert actions.shape == (batch, action_size)
    assert bool(jnp.all(jnp.abs(actions) <= 1.0))           # tanh output range
    ref = _actor_reference(state, params, action_size)
    assert bool(jnp.allclose(actions, ref, atol=2e-2, rtol=2e-2))

    # Case 2: awkward batch -> exercises batch padding + multi-step parallel grid.
    batch2 = 528
    state2 = jax.random.normal(k_state2, (batch2, state_size), dtype=jnp.float32)
    actions2 = jax.block_until_ready(actor_forward(state2, params, action_size=action_size))
    assert actions2.shape == (batch2, action_size)
    assert bool(jnp.all(jnp.abs(actions2) <= 1.0))
    ref2 = _actor_reference(state2, params, action_size)
    assert bool(jnp.allclose(actions2, ref2, atol=2e-2, rtol=2e-2))

    print("KERNEL_OK")
</pallas_src>

<mosaic_0001>
module attributes {stable_mosaic.version = 11 : i64} {
  func.func @actor_kernel(%arg0: i32, %arg1: memref<8x24xbf16, #tpu.memory_space<vmem>>, %arg2: memref<128x512xbf16, #tpu.memory_space<vmem>>, %arg3: memref<1x512xf32, #tpu.memory_space<vmem>>, %arg4: memref<512x384xbf16, #tpu.memory_space<vmem>>, %arg5: memref<1x384xf32, #tpu.memory_space<vmem>>, %arg6: memref<384x128xbf16, #tpu.memory_space<vmem>>, %arg7: memref<1x128xf32, #tpu.memory_space<vmem>>, %arg8: memref<8x128xf32, #tpu.memory_space<vmem>>, %arg9: memref<8x128xbf16, #tpu.memory_space<vmem>>) attributes {dimension_semantics = [#tpu.dimension_semantics<parallel>], iteration_bounds = array<i64: 1>, scalar_prefetch = 0 : i64, scratch_operands = 1 : i64, tpu.core_type = #tpu.core_type<tc>, window_params = [{transform_indices = @transform_0, window_bounds = array<i64: 8, 24>}, {pipeline_mode = #tpu.pipeline_mode<synchronous>, transform_indices = @transform_1, window_bounds = array<i64: 128, 512>}, {pipeline_mode = #tpu.pipeline_mode<synchronous>, transform_indices = @transform_2, window_bounds = array<i64: 1, 512>}, {pipeline_mode = #tpu.pipeline_mode<synchronous>, transform_indices = @transform_3, window_bounds = array<i64: 512, 384>}, {pipeline_mode = #tpu.pipeline_mode<synchronous>, transform_indices = @transform_4, window_bounds = array<i64: 1, 384>}, {pipeline_mode = #tpu.pipeline_mode<synchronous>, transform_indices = @transform_5, window_bounds = array<i64: 384, 128>}, {pipeline_mode = #tpu.pipeline_mode<synchronous>, transform_indices = @transform_6, window_bounds = array<i64: 1, 128>}, {transform_indices = @transform_7, window_bounds = array<i64: 8, 128>}]} {
    %cst = arith.constant 0.000000e+00 : bf16
    %0 = vector.broadcast %cst : bf16 to vector<8x128xbf16>
    %c0 = arith.constant 0 : index
    %c0_0 = arith.constant 0 : index
    %1 = vector.load %arg9[%c0, %c0_0] : memref<8x128xbf16, #tpu.memory_space<vmem>>, vector<8x128xbf16>
    tpu.vector_store %arg9[%c0, %c0_0], %0 {strides = array<i32>} : memref<8x128xbf16, #tpu.memory_space<vmem>>, vector<8x128xbf16>,
    %c0_1 = arith.constant 0 : index
    %c0_2 = arith.constant 0 : index
    %2 = vector.load %arg1[%c0_1, %c0_2] : memref<8x24xbf16, #tpu.memory_space<vmem>>, vector<8x24xbf16>
    %c0_3 = arith.constant 0 : index
    %c0_4 = arith.constant 0 : index
    %3 = vector.load %arg9[%c0_3, %c0_4] : memref<8x128xbf16, #tpu.memory_space<vmem>>, vector<8x24xbf16>
    tpu.vector_store %arg9[%c0_3, %c0_4], %2 {strides = array<i32>} : memref<8x128xbf16, #tpu.memory_space<vmem>>, vector<8x24xbf16>,
    %c0_5 = arith.constant 0 : index
    %c0_6 = arith.constant 0 : index
    %4 = vector.load %arg9[%c0_5, %c0_6] : memref<8x128xbf16, #tpu.memory_space<vmem>>, vector<8x128xbf16>
    %c0_7 = arith.constant 0 : index
    %c0_8 = arith.constant 0 : index
    %5 = vector.load %arg2[%c0_7, %c0_8] : memref<128x512xbf16, #tpu.memory_space<vmem>>, vector<128x512xbf16>
    %cst_9 = arith.constant dense<0.000000e+00> : vector<8x512xf32>
    %6 = tpu.matmul %4, %5, %cst_9 {dimension_numbers = #tpu.dot_dimension_numbers<[1], [0], [0], [1], [0, 0, 1, 1], [], []>} : vector<8x128xbf16>, vector<128x512xbf16>, vector<8x512xf32> -> vector<8x512xf32>
    %c0_10 = arith.constant 0 : index
    %c0_11 = arith.constant 0 : index
    %7 = vector.load %arg3[%c0_10, %c0_11] : memref<1x512xf32, #tpu.memory_space<vmem>>, vector<1x512xf32>
    %8 = vector.broadcast %7 : vector<1x512xf32> to vector<8x512xf32>
    %9 = arith.addf %6, %8 : vector<8x512xf32>
    %cst_12 = arith.constant 0.000000e+00 : f32
    %10 = vector.broadcast %cst_12 : f32 to vector<8x512xf32>
    %11 = arith.maximumf %9, %10 : vector<8x512xf32>
    %12 = arith.truncf %11 : vector<8x512xf32> to vector<8x512xbf16>
    %c0_13 = arith.constant 0 : index
    %c0_14 = arith.constant 0 : index
    %13 = vector.load %arg4[%c0_13, %c0_14] : memref<512x384xbf16, #tpu.memory_space<vmem>>, vector<512x384xbf16>
    %cst_15 = arith.constant dense<0.000000e+00> : vector<8x384xf32>
    %14 = tpu.matmul %12, %13, %cst_15 {dimension_numbers = #tpu.dot_dimension_numbers<[1], [0], [0], [1], [0, 0, 1, 1], [], []>} : vector<8x512xbf16>, vector<512x384xbf16>, vector<8x384xf32> -> vector<8x384xf32>
    %c0_16 = arith.constant 0 : index
    %c0_17 = arith.constant 0 : index
    %15 = vector.load %arg5[%c0_16, %c0_17] : memref<1x384xf32, #tpu.memory_space<vmem>>, vector<1x384xf32>
    %16 = vector.broadcast %15 : vector<1x384xf32> to vector<8x384xf32>
    %17 = arith.addf %14, %16 : vector<8x384xf32>
    %cst_18 = arith.constant 0.000000e+00 : f32
    %18 = vector.broadcast %cst_18 : f32 to vector<8x384xf32>
    %19 = arith.maximumf %17, %18 : vector<8x384xf32>
    %20 = arith.truncf %19 : vector<8x384xf32> to vector<8x384xbf16>
    %c0_19 = arith.constant 0 : index
    %c0_20 = arith.constant 0 : index
    %21 = vector.load %arg6[%c0_19, %c0_20] : memref<384x128xbf16, #tpu.memory_space<vmem>>, vector<384x128xbf16>
    %cst_21 = arith.constant dense<0.000000e+00> : vector<8x128xf32>
    %22 = tpu.matmul %20, %21, %cst_21 {dimension_numbers = #tpu.dot_dimension_numbers<[1], [0], [0], [1], [0, 0, 1, 1], [], []>} : vector<8x384xbf16>, vector<384x128xbf16>, vector<8x128xf32> -> vector<8x128xf32>
    %c0_22 = arith.constant 0 : index
    %c0_23 = arith.constant 0 : index
    %23 = vector.load %arg7[%c0_22, %c0_23] : memref<1x128xf32, #tpu.memory_space<vmem>>, vector<1x128xf32>
    %24 = vector.broadcast %23 : vector<1x128xf32> to vector<8x128xf32>
    %25 = arith.addf %22, %24 : vector<8x128xf32>
    %26 = math.tanh %25 : vector<8x128xf32>
    %c0_24 = arith.constant 0 : index
    %c0_25 = arith.constant 0 : index
    %27 = vector.load %arg8[%c0_24, %c0_25] : memref<8x128xf32, #tpu.memory_space<vmem>>, vector<8x128xf32>
    tpu.vector_store %arg8[%c0_24, %c0_25], %26 {strides = array<i32>} : memref<8x128xf32, #tpu.memory_space<vmem>>, vector<8x128xf32>,
    return
  }
  func.func @transform_0(%arg0: i32) -> (i32, i32) {
    %c0_i32 = arith.constant 0 : i32
    %c0_i32_0 = arith.constant 0 : i32
    return %arg0, %c0_i32 : i32, i32
  }
  func.func @transform_1(%arg0: i32) -> (i32, i32) {
    %c0_i32 = arith.constant 0 : i32
    %c0_i32_0 = arith.constant 0 : i32
    %c0_i32_1 = arith.constant 0 : i32
    return %c0_i32, %c0_i32_0 : i32, i32
  }
  func.func @transform_2(%arg0: i32) -> (i32, i32) {
    %c0_i32 = arith.constant 0 : i32
    %c0_i32_0 = arith.constant 0 : i32
    %c0_i32_1 = arith.constant 0 : i32
    return %c0_i32, %c0_i32_0 : i32, i32
  }
  func.func @transform_3(%arg0: i32) -> (i32, i32) {
    %c0_i32 = arith.constant 0 : i32
    %c0_i32_0 = arith.constant 0 : i32
    %c0_i32_1 = arith.constant 0 : i32
    return %c0_i32, %c0_i32_0 : i32, i32
  }
  func.func @transform_4(%arg0: i32) -> (i32, i32) {
    %c0_i32 = arith.constant 0 : i32
    %c0_i32_0 = arith.constant 0 : i32
    %c0_i32_1 = arith.constant 0 : i32
    return %c0_i32, %c0_i32_0 : i32, i32
  }
  func.func @transform_5(%arg0: i32) -> (i32, i32) {
    %c0_i32 = arith.constant 0 : i32
    %c0_i32_0 = arith.constant 0 : i32
    %c0_i32_1 = arith.constant 0 : i32
    return %c0_i32, %c0_i32_0 : i32, i32
  }
  func.func @transform_6(%arg0: i32) -> (i32, i32) {
    %c0_i32 = arith.constant 0 : i32
    %c0_i32_0 = arith.constant 0 : i32
    %c0_i32_1 = arith.constant 0 : i32
    return %c0_i32, %c0_i32_0 : i32, i32
  }
  func.func @transform_7(%arg0: i32) -> (i32, i32) {
    %c0_i32 = arith.constant 0 : i32
    %c0_i32_0 = arith.constant 0 : i32
    return %arg0, %c0_i32 : i32, i32
  }
}

</mosaic_0001>

<llo_original>
// kernel: tpu_custom_call.1
$region0: #{tpu_custom_call.1}
  #allocation0 [shape = 'u32[]', space=smem, size = 0x4, offset = 0x4, fixed_abs, tag = 'smem constant byte address 0x4 - core index']
  #allocation1 [shape = 'u32[144,128]{1,0:T(1,128)}', space=vmem, size = 0x12000, scoped, tag = 'internal scratch']
  #allocation2 [shape = 'bf16[8,128]{1,0:T(8,128)(2,1)}', space=vmem, size = 0x800, scoped, tag = 'scratch operand']
  %s0 = inlined_call_operand.hbm [shape: bf16[8,24], index: 0, kind: input, shape index: {}]
  %s1 = inlined_call_operand.hbm [shape: bf16[128,512], index: 1, kind: input, shape index: {}]
  %s2 = inlined_call_operand.vmem [shape: f32[1,512], index: 2, kind: input, shape index: {}]
  %s3 = inlined_call_operand.hbm [shape: bf16[512,384], index: 3, kind: input, shape index: {}]
  %s4 = inlined_call_operand.vmem [shape: f32[1,384], index: 4, kind: input, shape index: {}]
  %s5 = inlined_call_operand.hbm [shape: bf16[384,128], index: 5, kind: input, shape index: {}]
  %s6 = inlined_call_operand.vmem [shape: f32[1,128], index: 6, kind: input, shape index: {}]
  %s7 = inlined_call_operand.hbm [shape: f32[8,128], index: 7, kind: output, shape index: {}]
  %s8 = sld [smem:[#allocation0]]
  $region54: #{tpu_custom_call.1} parent=0
    _
  %s10 = ssub.s32 1, %s8
  %s11 = scalar_select 0, %s10, %s8
  $region1: #{tpu_custom_call.1} parent=0
    #allocation3 [shape = 'u8[2048]{0}', space=vmem, size = 0x800, scoped, tag = 'input window, operand 0, single buffered']
    #allocation4 [shape = 's32[1]{0}', space=sflag, size = 0x4, scoped, tag = 'scoped memory for tpu_custom_call.1']
    #allocation5 [shape = 's32[1]{0}', space=sflag, size = 0x4, scoped, tag = 'scoped memory for tpu_custom_call.1']
    #allocation6 [shape = 'u8[131072]{0}', space=vmem, size = 0x20000, scoped, tag = 'input window, operand 1, single buffered']
    #allocation7 [shape = 's32[1]{0}', space=sflag, size = 0x4, scoped, tag = 'scoped memory for tpu_custom_call.1']
    #allocation8 [shape = 'u8[393216]{0}', space=vmem, size = 0x60000, scoped, tag = 'input window, operand 3, single buffered']
    #allocation9 [shape = 'u8[98304]{0}', space=vmem, size = 0x18000, scoped, tag = 'input window, operand 5, single buffered']
    #allocation10 [shape = 's32[1]{0}', space=sflag, size = 0x4, scoped, tag = 'scoped memory for tpu_custom_call.1']
    #allocation11 [shape = 'u8[4096]{0}', space=vmem, size = 0x1000, scoped, tag = 'output window, operand 0, single buffered']
    %12 = vsyncpa [#allocation4], 0
    %13 = vsyncpa [#allocation7], 0
    %14 = vsyncpa [#allocation10], 0
    %15 = vsyncpa [#allocation5], 0
    // Predicated region
    $region2: #{tpu_custom_call.1} parent=1 // pred_check
      _
    $region3: #{tpu_custom_call.1} parent=1 // pred_check_branch
      %17 = sbr.rel (0) target = $region5
    $region4: #{tpu_custom_call.1} parent=1 // pred_region
      %s19 = ssub.s32 64, 64
      %20 = vsyncadd [#allocation4], %s19
      %s22 = sshll.u32 [#allocation3], 4
      %s23 = int_to_ptr.vmem [resolvable:$true] %s22
      %25 = dma.hbm_to_vmem [thread:$0]  %s0, 64, %s23, [#allocation4]
    $region5: #{tpu_custom_call.1} parent=1 // pred_fallthru
      _
    // Predicated region
    $region6: #{tpu_custom_call.1} parent=1 // pred_check
      _
    $region7: #{tpu_custom_call.1} parent=1 // pred_check_branch
      %27 = sbr.rel (0) target = $region9
    $region8: #{tpu_custom_call.1} parent=1 // pred_region
      %s29 = ssub.s32 4096, 4096
      %30 = vsyncadd [#allocation7], %s29
      %s31 = sshll.u32 [#allocation6], 4
      %s32 = int_to_ptr.vmem [resolvable:$true] %s31
      %37 = dma.hbm_to_vmem [thread:$0]  %s1, 4096, %s32, [#allocation7], 256, 256, 16
    $region9: #{tpu_custom_call.1} parent=1 // pred_fallthru
      _
    // Predicated region
    $region10: #{tpu_custom_call.1} parent=1 // pred_check
      _
    $region11: #{tpu_custom_call.1} parent=1 // pred_check_branch
      %39 = sbr.rel (0) target = $region13
    $region12: #{tpu_custom_call.1} parent=1 // pred_region
      _
    $region13: #{tpu_custom_call.1} parent=1 // pred_fallthru
      _
    // Predicated region
    $region14: #{tpu_custom_call.1} parent=1 // pred_check
      _
    $region15: #{tpu_custom_call.1} parent=1 // pred_check_branch
      %41 = sbr.rel (0) target = $region17
    $region16: #{tpu_custom_call.1} parent=1 // pred_region
      %s43 = ssub.s32 12288, 12288
      %44 = vsyncadd [#allocation7], %s43
      %s45 = sshll.u32 [#allocation8], 4
      %s46 = int_to_ptr.vmem [resolvable:$true] %s45
      %51 = dma.hbm_to_vmem [thread:$0]  %s3, 12288, %s46, [#allocation7], 192, 192, 12
    $region17: #{tpu_custom_call.1} parent=1 // pred_fallthru
      _
    // Predicated region
    $region18: #{tpu_custom_call.1} parent=1 // pred_check
      _
    $region19: #{tpu_custom_call.1} parent=1 // pred_check_branch
      %53 = sbr.rel (0) target = $region21
    $region20: #{tpu_custom_call.1} parent=1 // pred_region
      _
    $region21: #{tpu_custom_call.1} parent=1 // pred_fallthru
      _
    // Predicated region
    $region22: #{tpu_custom_call.1} parent=1 // pred_check
      _
    $region23: #{tpu_custom_call.1} parent=1 // pred_check_branch
      %55 = sbr.rel (0) target = $region25
    $region24: #{tpu_custom_call.1} parent=1 // pred_region
      %s57 = ssub.s32 3072, 3072
      %58 = vsyncadd [#allocation10], %s57
      %s59 = sshll.u32 [#allocation9], 4
      %s60 = int_to_ptr.vmem [resolvable:$true] %s59
      %65 = dma.hbm_to_vmem [thread:$0]  %s5, 3072, %s60, [#allocation10], 64, 64, 4
    $region25: #{tpu_custom_call.1} parent=1 // pred_fallthru
      _
    // Predicated region
    $region26: #{tpu_custom_call.1} parent=1 // pred_check
      _
    $region27: #{tpu_custom_call.1} parent=1 // pred_check_branch
      %67 = sbr.rel (0) target = $region29
    $region28: #{tpu_custom_call.1} parent=1 // pred_region
      _
    $region29: #{tpu_custom_call.1} parent=1 // pred_fallthru
      _
    // Predicated region
    $region30: #{tpu_custom_call.1} parent=1 // pred_check
      _
    $region31: #{tpu_custom_call.1} parent=1 // pred_check_branch
      %69 = sbr.rel (0) target = $region33
    $region32: #{tpu_custom_call.1} parent=1 // pred_region
      %70 = dma.done [#allocation4], 64
    $region33: #{tpu_custom_call.1} parent=1 // pred_fallthru
      _
    // Predicated region
    $region34: #{tpu_custom_call.1} parent=1 // pred_check
      _
    $region35: #{tpu_custom_call.1} parent=1 // pred_check_branch
      %72 = sbr.rel (0) target = $region37
    $region36: #{tpu_custom_call.1} parent=1 // pred_region
      %73 = dma.done [#allocation7], 4096
    $region37: #{tpu_custom_call.1} parent=1 // pred_fallthru
      _
    // Predicated region
    $region38: #{tpu_custom_call.1} parent=1 // pred_check
      _
    $region39: #{tpu_custom_call.1} parent=1 // pred_check_branch
      %75 = sbr.rel (0) target = $region41
    $region40: #{tpu_custom_call.1} parent=1 // pred_region
      %76 = dma.done [#allocation7], 12288
    $region41: #{tpu_custom_call.1} parent=1 // pred_fallthru
      _
    // Predicated region
    $region42: #{tpu_custom_call.1} parent=1 // pred_check
      _
    $region43: #{tpu_custom_call.1} parent=1 // pred_check_branch
      %78 = sbr.rel (0) target = $region45
    $region44: #{tpu_custom_call.1} parent=1 // pred_region
      %79 = dma.done [#allocation10], 3072
    $region45: #{tpu_custom_call.1} parent=1 // pred_fallthru
      _
    %81 = vst [vmem:[#allocation2] sm:$0xf] 0
    %v82 = vld [vmem:[#allocation3] sm:$0xf]
    %vm83 = vcmask 191488
    %84 = vst.msk [vmem:[#allocation2] sm:$0xf] %vm83, %v82
    %v85 = vld [vmem:[#allocation2] sm:$0xf]
    %v86 = vld [vmem:[#allocation6] sm:$0xff]
    %v87 = vld [vmem:[#allocation6 + $0x8] sm:$0xff]
    %v88 = vld [vmem:[#allocation6 + $0x10] sm:$0xff]
    %v89 = vld [vmem:[#allocation6 + $0x18] sm:$0xff]
    %v90 = vld [vmem:[#allocation6 + $0x20] sm:$0xff]
    %v91 = vld [vmem:[#allocation6 + $0x28] sm:$0xff]
    %v92 = vld [vmem:[#allocation6 + $0x30] sm:$0xff]
    %v93 = vld [vmem:[#allocation6 + $0x38] sm:$0xff]
    %v94 = vld [vmem:[#allocation6 + $0x40] sm:$0xff]
    %v95 = vld [vmem:[#allocation6 + $0x48] sm:$0xff]
    %v96 = vld [vmem:[#allocation6 + $0x50] sm:$0xff]
    %v97 = vld [vmem:[#allocation6 + $0x58] sm:$0xff]
    %v98 = vld [vmem:[#allocation6 + $0x60] sm:$0xff]
    %v99 = vld [vmem:[#allocation6 + $0x68] sm:$0xff]
    %v100 = vld [vmem:[#allocation6 + $0x70] sm:$0xff]
    %v101 = vld [vmem:[#allocation6 + $0x78] sm:$0xff]
    %v102 = vld [vmem:[#allocation6 + $0x80] sm:$0xff]
    %v103 = vld [vmem:[#allocation6 + $0x88] sm:$0xff]
    %v104 = vld [vmem:[#allocation6 + $0x90] sm:$0xff]
    %v105 = vld [vmem:[#allocation6 + $0x98] sm:$0xff]
    %v106 = vld [vmem:[#allocation6 + $0xa0] sm:$0xff]
    %v107 = vld [vmem:[#allocation6 + $0xa8] sm:$0xff]
    %v108 = vld [vmem:[#allocation6 + $0xb0] sm:$0xff]
    %v109 = vld [vmem:[#allocation6 + $0xb8] sm:$0xff]
    %v110 = vld [vmem:[#allocation6 + $0xc0] sm:$0xff]
    %v111 = vld [vmem:[#allocation6 + $0xc8] sm:$0xff]
    %v112 = vld [vmem:[#allocation6 + $0xd0] sm:$0xff]
    %v113 = vld [vmem:[#allocation6 + $0xd8] sm:$0xff]
    %v114 = vld [vmem:[#allocation6 + $0xe0] sm:$0xff]
    %v115 = vld [vmem:[#allocation6 + $0xe8] sm:$0xff]
    %v116 = vld [vmem:[#allocation6 + $0xf0] sm:$0xff]
    %v117 = vld [vmem:[#allocation6 + $0xf8] sm:$0xff]
    %v118 = vld [vmem:[%s2] sm:$0xf]
    %v120 = vlaneseq
    %v121 = vshrl.u32 %v120, 7
    %v122 = vsub.s32 0, %v121
    %v123 = vrot.slane %v118, %v122
    %v124 = vlaneseq
    %v125 = vshrl.u32 %v124, 7
    %v126 = vsub.s32 1, %v125
    %v127 = vrot.slane %v118, %v126
    %v128 = vlaneseq
    %v129 = vshrl.u32 %v128, 7
    %v130 = vsub.s32 2, %v129
    %v131 = vrot.slane %v118, %v130
    %v132 = vlaneseq
    %v133 = vshrl.u32 %v132, 7
    %v134 = vsub.s32 3, %v133
    %v135 = vrot.slane %v118, %v134
    %v172 = vunpack.c.l.b16 %v86
    %v173 = vunpack.c.h.b16 %v86
    %v174 = vunpack.c.l.b16 %v87
    %v175 = vunpack.c.h.b16 %v87
    %v176 = vunpack.c.l.b16 %v88
    %v177 = vunpack.c.h.b16 %v88
    %v178 = vunpack.c.l.b16 %v89
    %v179 = vunpack.c.h.b16 %v89
    %v180 = vunpack.c.l.b16 %v90
    %v181 = vunpack.c.h.b16 %v90
    %v182 = vunpack.c.l.b16 %v91
    %v183 = vunpack.c.h.b16 %v91
    %v184 = vunpack.c.l.b16 %v92
    %v185 = vunpack.c.h.b16 %v92
    %v186 = vunpack.c.l.b16 %v93
    %v187 = vunpack.c.h.b16 %v93
    %v188 = vunpack.c.l.b16 %v94
    %v189 = vunpack.c.h.b16 %v94
    %v190 = vunpack.c.l.b16 %v95
    %v191 = vunpack.c.h.b16 %v95
    %v192 = vunpack.c.l.b16 %v96
    %v193 = vunpack.c.h.b16 %v96
    %v194 = vunpack.c.l.b16 %v97
    %v195 = vunpack.c.h.b16 %v97
    %v196 = vunpack.c.l.b16 %v98
    %v197 = vunpack.c.h.b16 %v98
    %v198 = vunpack.c.l.b16 %v99
    %v199 = vunpack.c.h.b16 %v99
    %v200 = vunpack.c.l.b16 %v100
    %v201 = vunpack.c.h.b16 %v100
    %v202 = vunpack.c.l.b16 %v101
    %v203 = vunpack.c.h.b16 %v101
    %v204 = vunpack.c.l.b16 %v102
    %v205 = vunpack.c.h.b16 %v102
    %v206 = vunpack.c.l.b16 %v103
    %v207 = vunpack.c.h.b16 %v103
    %v208 = vunpack.c.l.b16 %v104
    %v209 = vunpack.c.h.b16 %v104
    %v210 = vunpack.c.l.b16 %v105
    %v211 = vunpack.c.h.b16 %v105
    %v212 = vunpack.c.l.b16 %v106
    %v213 = vunpack.c.h.b16 %v106
    %v214 = vunpack.c.l.b16 %v107
    %v215 = vunpack.c.h.b16 %v107
    %v216 = vunpack.c.l.b16 %v108
    %v217 = vunpack.c.h.b16 %v108
    %v218 = vunpack.c.l.b16 %v109
    %v219 = vunpack.c.h.b16 %v109
    %v220 = vunpack.c.l.b16 %v110
    %v221 = vunpack.c.h.b16 %v110
    %v222 = vunpack.c.l.b16 %v111
    %v223 = vunpack.c.h.b16 %v111
    %v224 = vunpack.c.l.b16 %v112
    %v225 = vunpack.c.h.b16 %v112
    %v226 = vunpack.c.l.b16 %v113
    %v227 = vunpack.c.h.b16 %v113
    %v228 = vunpack.c.l.b16 %v114
    %v229 = vunpack.c.h.b16 %v114
    %v230 = vunpack.c.l.b16 %v115
    %v231 = vunpack.c.h.b16 %v115
    %v232 = vunpack.c.l.b16 %v116
    %v233 = vunpack.c.h.b16 %v116
    %v234 = vunpack.c.l.b16 %v117
    %v235 = vunpack.c.h.b16 %v117
    %v236 = vpack.c.b16 %v176, %v172
    %v237 = vpack.c.b16 %v177, %v173
    %v238 = vpack.c.b16 %v178, %v174
    %v239 = vpack.c.b16 %v179, %v175
    %v240 = vpack.c.b16 %v184, %v180
    %v241 = vpack.c.b16 %v185, %v181
    %v242 = vpack.c.b16 %v186, %v182
    %v243 = vpack.c.b16 %v187, %v183
    %v244 = vpack.c.b16 %v192, %v188
    %v245 = vpack.c.b16 %v193, %v189
    %v246 = vpack.c.b16 %v194, %v190
    %v247 = vpack.c.b16 %v195, %v191
    %v248 = vpack.c.b16 %v200, %v196
    %v249 = vpack.c.b16 %v201, %v197
    %v250 = vpack.c.b16 %v202, %v198
    %v251 = vpack.c.b16 %v203, %v199
    %v252 = vpack.c.b16 %v208, %v204
    %v253 = vpack.c.b16 %v209, %v205
    %v254 = vpack.c.b16 %v210, %v206
    %v255 = vpack.c.b16 %v211, %v207
    %v256 = vpack.c.b16 %v216, %v212
    %v257 = vpack.c.b16 %v217, %v213
    %v258 = vpack.c.b16 %v218, %v214
    %v259 = vpack.c.b16 %v219, %v215
    %v260 = vpack.c.b16 %v224, %v220
    %v261 = vpack.c.b16 %v225, %v221
    %v262 = vpack.c.b16 %v226, %v222
    %v263 = vpack.c.b16 %v227, %v223
    %v264 = vpack.c.b16 %v232, %v228
    %v265 = vpack.c.b16 %v233, %v229
    %v266 = vpack.c.b16 %v234, %v230
    %v267 = vpack.c.b16 %v235, %v231
    %300 = vmatprep.subr.bf16.mxu0 %v237
    %301 = vmatpush1.bf16.msra.mxu0 %v236
    %302 = vmatprep.subr.bf16.mxu0 %v241
    %303 = vmatpush1.bf16.msra.mxu0 %v240
    %304 = vmatprep.subr.bf16.mxu0 %v245
    %305 = vmatpush1.bf16.msra.mxu0 %v244
    %306 = vmatprep.subr.bf16.mxu0 %v249
    %307 = vmatpush1.bf16.msra.mxu0 %v248
    %308 = vmatprep.subr.bf16.mxu0 %v253
    %309 = vmatpush1.bf16.msra.mxu0 %v252
    %310 = vmatprep.subr.bf16.mxu0 %v257
    %311 = vmatpush1.bf16.msra.mxu0 %v256
    %312 = vmatprep.subr.bf16.mxu0 %v261
    %313 = vmatpush1.bf16.msra.mxu0 %v260
    %314 = vmatprep.subr.bf16.mxu0 %v265
    %315 = vmatpush1.bf16.msra.mxu0 %v264
    %316 = vmatprep.subr.bf16.mxu0 0
    %317 = vmatpush1.bf16.msra.mxu0 0
    %318 = vmatprep.subr.bf16.mxu0 0
    %319 = vmatpush1.bf16.msra.mxu0 0
    %320 = vmatprep.subr.bf16.mxu0 0
    %321 = vmatpush1.bf16.msra.mxu0 0
    %322 = vmatprep.subr.bf16.mxu0 0
    %323 = vmatpush1.bf16.msra.mxu0 0
    %324 = vmatprep.subr.bf16.mxu0 0
    %325 = vmatpush1.bf16.msra.mxu0 0
    %326 = vmatprep.subr.bf16.mxu0 0
    %327 = vmatpush1.bf16.msra.mxu0 0
    %328 = vmatprep.subr.bf16.mxu0 0
    %329 = vmatpush1.bf16.msra.mxu0 0
    %330 = vmatprep.subr.bf16.mxu0 0
    %331 = vmatpush1.bf16.msra.mxu0 0
    %332 = vmatprep.mubr.bf16.mxu0 0
    %333 = vmatmul.mubr.bf16.gmra.mrb[0].mxu0 %v85
    %v334 = vpop.f32.mrb[0].mxu0
    %v335 = vadd.f32 %v123, %v334
    %v336 = vpop.f32.mrb[0].mxu0
    %v337 = vadd.f32 %v127, %v336
    %v338 = vpop.f32.mrb[0].mxu0
    %v339 = vpop.f32.mrb[0].mxu0
    %340 = vdwg.mxu0
    %341 = vmatprep.subr.bf16.mxu0 %v239
    %342 = vmatpush1.bf16.msra.mxu0 %v238
    %343 = vmatprep.subr.bf16.mxu0 %v243
    %344 = vmatpush1.bf16.msra.mxu0 %v242
    %345 = vmatprep.subr.bf16.mxu0 %v247
    %346 = vmatpush1.bf16.msra.mxu0 %v246
    %347 = vmatprep.subr.bf16.mxu0 %v251
    %348 = vmatpush1.bf16.msra.mxu0 %v250
    %349 = vmatprep.subr.bf16.mxu0 %v255
    %350 = vmatpush1.bf16.msra.mxu0 %v254
    %351 = vmatprep.subr.bf16.mxu0 %v259
    %352 = vmatpush1.bf16.msra.mxu0 %v258
    %353 = vmatprep.subr.bf16.mxu0 %v263
    %354 = vmatpush1.bf16.msra.mxu0 %v262
    %355 = vmatprep.subr.bf16.mxu0 %v267
    %356 = vmatpush1.bf16.msra.mxu0 %v266
    %357 = vmatprep.subr.bf16.mxu0 0
    %358 = vmatpush1.bf16.msra.mxu0 0
    %359 = vmatprep.subr.bf16.mxu0 0
    %360 = vmatpush1.bf16.msra.mxu0 0
    %361 = vmatprep.subr.bf16.mxu0 0
    %362 = vmatpush1.bf16.msra.mxu0 0
    %363 = vmatprep.subr.bf16.mxu0 0
    %364 = vmatpush1.bf16.msra.mxu0 0
    %365 = vmatprep.subr.bf16.mxu0 0
    %366 = vmatpush1.bf16.msra.mxu0 0
    %367 = vmatprep.subr.bf16.mxu0 0
    %368 = vmatpush1.bf16.msra.mxu0 0
    %369 = vmatprep.subr.bf16.mxu0 0
    %370 = vmatpush1.bf16.msra.mxu0 0
    %371 = vmatprep.subr.bf16.mxu0 0
    %372 = vmatpush1.bf16.msra.mxu0 0
    %373 = vmatprep.mubr.bf16.mxu0 0
    %374 = vmatmul.mubr.bf16.gmra.mrb[0].mxu0 %v85
    %v375 = vpop.f32.mrb[0].mxu0
    %v376 = vadd.f32 %v131, %v375
    %v377 = vpop.f32.mrb[0].mxu0
    %v378 = vadd.f32 %v135, %v377
    %v379 = vpop.f32.mrb[0].mxu0
    %v380 = vpop.f32.mrb[0].mxu0
    %381 = vdwg.mxu0
    %v382 = vmax.f32 %v335, 0.0
    %v383 = vmax.f32 %v337, 0.0
    %v384 = vmax.f32 %v376, 0.0
    %v385 = vmax.f32 %v378, 0.0
    %v386 = vpack.c.bf16 %v382, %v382
    %v387 = vpack.c.bf16 %v383, %v383
    %v388 = vpack.c.bf16 %v384, %v384
    %v389 = vpack.c.bf16 %v385, %v385
    %v390 = vld [vmem:[#allocation8] sm:$0xff]
    %v391 = vld [vmem:[#allocation8 + $0x8] sm:$0xf]
    %v392 = vld [vmem:[#allocation8 + $0xc] sm:$0xff]
    %v393 = vld [vmem:[#allocation8 + $0x14] sm:$0xf]
    %v394 = vld [vmem:[#allocation8 + $0x18] sm:$0xff]
    %v395 = vld [vmem:[#allocation8 + $0x20] sm:$0xf]
    %v396 = vld [vmem:[#allocation8 + $0x24] sm:$0xff]
    %v397 = vld [vmem:[#allocation8 + $0x2c] sm:$0xf]
    %v398 = vld [vmem:[#allocation8 + $0x30] sm:$0xff]
    %v399 = vld [vmem:[#allocation8 + $0x38] sm:$0xf]
    %v400 = vld [vmem:[#allocation8 + $0x3c] sm:$0xff]
    %v401 = vld [vmem:[#allocation8 + $0x44] sm:$0xf]
    %v402 = vld [vmem:[#allocation8 + $0x48] sm:$0xff]
    %v403 = vld [vmem:[#allocation8 + $0x50] sm:$0xf]
    %v404 = vld [vmem:[#allocation8 + $0x54] sm:$0xff]
    %v405 = vld [vmem:[#allocation8 + $0x5c] sm:$0xf]
    %v406 = vld [vmem:[#allocation8 + $0x60] sm:$0xff]
    %v407 = vld [vmem:[#allocation8 + $0x68] sm:$0xf]
    %v408 = vld [vmem:[#allocation8 + $0x6c] sm:$0xff]
    %v409 = vld [vmem:[#allocation8 + $0x74] sm:$0xf]
    %v410 = vld [vmem:[#allocation8 + $0x78] sm:$0xff]
    %v411 = vld [vmem:[#allocation8 + $0x80] sm:$0xf]
    %v412 = vld [vmem:[#allocation8 + $0x84] sm:$0xff]
    %v413 = vld [vmem:[#allocation8 + $0x8c] sm:$0xf]
    %v414 = vld [vmem:[#allocation8 + $0x90] sm:$0xff]
    %v415 = vld [vmem:[#allocation8 + $0x98] sm:$0xf]
    %v416 = vld [vmem:[#allocation8 + $0x9c] sm:$0xff]
    %v417 = vld [vmem:[#allocation8 + $0xa4] sm:$0xf]
    %v418 = vld [vmem:[#allocation8 + $0xa8] sm:$0xff]
    %v419 = vld [vmem:[#allocation8 + $0xb0] sm:$0xf]
    %v420 = vld [vmem:[#allocation8 + $0xb4] sm:$0xff]
    %v421 = vld [vmem:[#allocation8 + $0xbc] sm:$0xf]
    %v422 = vld [vmem:[#allocation8 + $0xc0] sm:$0xff]
    %v423 = vld [vmem:[#allocation8 + $0xc8] sm:$0xf]
    %v424 = vld [vmem:[#allocation8 + $0xcc] sm:$0xff]
    %v425 = vld [vmem:[#allocation8 + $0xd4] sm:$0xf]
    %v426 = vld [vmem:[#allocation8 + $0xd8] sm:$0xff]
    %v427 = vld [vmem:[#allocation8 + $0xe0] sm:$0xf]
    %v428 = vld [vmem:[#allocation8 + $0xe4] sm:$0xff]
    %v429 = vld [vmem:[#allocation8 + $0xec] sm:$0xf]
    %v430 = vld [vmem:[#allocation8 + $0xf0] sm:$0xff]
    %v431 = vld [vmem:[#allocation8 + $0xf8] sm:$0xf]
    %v432 = vld [vmem:[#allocation8 + $0xfc] sm:$0xff]
    %v433 = vld [vmem:[#allocation8 + $0x104] sm:$0xf]
    %v434 = vld [vmem:[#allocation8 + $0x108] sm:$0xff]
    %v435 = vld [vmem:[#allocation8 + $0x110] sm:$0xf]
    %v436 = vld [vmem:[#allocation8 + $0x114] sm:$0xff]
    %v437 = vld [vmem:[#allocation8 + $0x11c] sm:$0xf]
    %v438 = vld [vmem:[#allocation8 + $0x120] sm:$0xff]
    %v439 = vld [vmem:[#allocation8 + $0x128] sm:$0xf]
    %v440 = vld [vmem:[#allocation8 + $0x12c] sm:$0xff]
    %v441 = vld [vmem:[#allocation8 + $0x134] sm:$0xf]
    %v442 = vld [vmem:[#allocation8 + $0x138] sm:$0xff]
    %v443 = vld [vmem:[#allocation8 + $0x140] sm:$0xf]
    %v444 = vld [vmem:[#allocation8 + $0x144] sm:$0xff]
    %v445 = vld [vmem:[#allocation8 + $0x14c] sm:$0xf]
    %v446 = vld [vmem:[#allocation8 + $0x150] sm:$0xff]
    %v447 = vld [vmem:[#allocation8 + $0x158] sm:$0xf]
    %v448 = vld [vmem:[#allocation8 + $0x15c] sm:$0xff]
    %v449 = vld [vmem:[#allocation8 + $0x164] sm:$0xf]
    %v450 = vld [vmem:[#allocation8 + $0x168] sm:$0xff]
    %v451 = vld [vmem:[#allocation8 + $0x170] sm:$0xf]
    %v452 = vld [vmem:[#allocation8 + $0x174] sm:$0xff]
    %v453 = vld [vmem:[#allocation8 + $0x17c] sm:$0xf]
    %v454 = vld [vmem:[#allocation8 + $0x180] sm:$0xff]
    %v455 = vld [vmem:[#allocation8 + $0x188] sm:$0xf]
    %v456 = vld [vmem:[#allocation8 + $0x18c] sm:$0xff]
    %v457 = vld [vmem:[#allocation8 + $0x194] sm:$0xf]
    %v458 = vld [vmem:[#allocation8 + $0x198] sm:$0xff]
    %v459 = vld [vmem:[#allocation8 + $0x1a0] sm:$0xf]
    %v460 = vld [vmem:[#allocation8 + $0x1a4] sm:$0xff]
    %v461 = vld [vmem:[#allocation8 + $0x1ac] sm:$0xf]
    %v462 = vld [vmem:[#allocation8 + $0x1b0] sm:$0xff]
    %v463 = vld [vmem:[#allocation8 + $0x1b8] sm:$0xf]
    %v464 = vld [vmem:[#allocation8 + $0x1bc] sm:$0xff]
    %v465 = vld [vmem:[#allocation8 + $0x1c4] sm:$0xf]
    %v466 = vld [vmem:[#allocation8 + $0x1c8] sm:$0xff]
    %v467 = vld [vmem:[#allocation8 + $0x1d0] sm:$0xf]
    %v468 = vld [vmem:[#allocation8 + $0x1d4] sm:$0xff]
    %v469 = vld [vmem:[#allocation8 + $0x1dc] sm:$0xf]
    %v470 = vld [vmem:[#allocation8 + $0x1e0] sm:$0xff]
    %v471 = vld [vmem:[#allocation8 + $0x1e8] sm:$0xf]
    %v472 = vld [vmem:[#allocation8 + $0x1ec] sm:$0xff]
    %v473 = vld [vmem:[#allocation8 + $0x1f4] sm:$0xf]
    %v474 = vld [vmem:[#allocation8 + $0x1f8] sm:$0xff]
    %v475 = vld [vmem:[#allocation8 + $0x200] sm:$0xf]
    %v476 = vld [vmem:[#allocation8 + $0x204] sm:$0xff]
    %v477 = vld [vmem:[#allocation8 + $0x20c] sm:$0xf]
    %v478 = vld [vmem:[#allocation8 + $0x210] sm:$0xff]
    %v479 = vld [vmem:[#allocation8 + $0x218] sm:$0xf]
    %v480 = vld [vmem:[#allocation8 + $0x21c] sm:$0xff]
    %v481 = vld [vmem:[#allocation8 + $0x224] sm:$0xf]
    %v482 = vld [vmem:[#allocation8 + $0x228] sm:$0xff]
    %v483 = vld [vmem:[#allocation8 + $0x230] sm:$0xf]
    %v484 = vld [vmem:[#allocation8 + $0x234] sm:$0xff]
    %v485 = vld [vmem:[#allocation8 + $0x23c] sm:$0xf]
    %v486 = vld [vmem:[#allocation8 + $0x240] sm:$0xff]
    %v487 = vld [vmem:[#allocation8 + $0x248] sm:$0xf]
    %v488 = vld [vmem:[#allocation8 + $0x24c] sm:$0xff]
    %v489 = vld [vmem:[#allocation8 + $0x254] sm:$0xf]
    %v490 = vld [vmem:[#allocation8 + $0x258] sm:$0xff]
    %v491 = vld [vmem:[#allocation8 + $0x260] sm:$0xf]
    %v492 = vld [vmem:[#allocation8 + $0x264] sm:$0xff]
    %v493 = vld [vmem:[#allocation8 + $0x26c] sm:$0xf]
    %v494 = vld [vmem:[#allocation8 + $0x270] sm:$0xff]
    %v495 = vld [vmem:[#allocation8 + $0x278] sm:$0xf]
    %v496 = vld [vmem:[#allocation8 + $0x27c] sm:$0xff]
    %v497 = vld [vmem:[#allocation8 + $0x284] sm:$0xf]
    %v498 = vld [vmem:[#allocation8 + $0x288] sm:$0xff]
    %v499 = vld [vmem:[#allocation8 + $0x290] sm:$0xf]
    %v500 = vld [vmem:[#allocation8 + $0x294] sm:$0xff]
    %v501 = vld [vmem:[#allocation8 + $0x29c] sm:$0xf]
    %v502 = vld [vmem:[#allocation8 + $0x2a0] sm:$0xff]
    %v503 = vld [vmem:[#allocation8 + $0x2a8] sm:$0xf]
    %v504 = vld [vmem:[#allocation8 + $0x2ac] sm:$0xff]
    %v505 = vld [vmem:[#allocation8 + $0x2b4] sm:$0xf]
    %v506 = vld [vmem:[#allocation8 + $0x2b8] sm:$0xff]
    %v507 = vld [vmem:[#allocation8 + $0x2c0] sm:$0xf]
    %v508 = vld [vmem:[#allocation8 + $0x2c4] sm:$0xff]
    %v509 = vld [vmem:[#allocation8 + $0x2cc] sm:$0xf]
    %v510 = vld [vmem:[#allocation8 + $0x2d0] sm:$0xff]
    %v511 = vld [vmem:[#allocation8 + $0x2d8] sm:$0xf]
    %v512 = vld [vmem:[#allocation8 + $0x2dc] sm:$0xff]
    %v513 = vld [vmem:[#allocation8 + $0x2e4] sm:$0xf]
    %v514 = vld [vmem:[#allocation8 + $0x2e8] sm:$0xff]
    %v515 = vld [vmem:[#allocation8 + $0x2f0] sm:$0xf]
    %v516 = vld [vmem:[#allocation8 + $0x2f4] sm:$0xff]
    %v517 = vld [vmem:[#allocation8 + $0x2fc] sm:$0xf]
    %v518 = vld [vmem:[%s4] sm:$0x7]
    %v520 = vlaneseq
    %v521 = vshrl.u32 %v520, 7
    %v522 = vsub.s32 0, %v521
    %v523 = vrot.slane %v518, %v522
    %v524 = vlaneseq
    %v525 = vshrl.u32 %v524, 7
    %v526 = vsub.s32 1, %v525
    %v527 = vrot.slane %v518, %v526
    %v528 = vlaneseq
    %v529 = vshrl.u32 %v528, 7
    %v530 = vsub.s32 2, %v529
    %v531 = vrot.slane %v518, %v530
    %v663 = vunpack.c.l.b16 %v390
    %v664 = vunpack.c.h.b16 %v390
    %v665 = vunpack.c.l.b16 %v391
    %v666 = vunpack.c.l.b16 %v392
    %v667 = vunpack.c.h.b16 %v392
    %v668 = vunpack.c.l.b16 %v393
    %v669 = vunpack.c.l.b16 %v394
    %v670 = vunpack.c.h.b16 %v394
    %v671 = vunpack.c.l.b16 %v395
    %v672 = vunpack.c.l.b16 %v396
    %v673 = vunpack.c.h.b16 %v396
    %v674 = vunpack.c.l.b16 %v397
    %v675 = vunpack.c.l.b16 %v398
    %v676 = vunpack.c.h.b16 %v398
    %v677 = vunpack.c.l.b16 %v399
    %v678 = vunpack.c.l.b16 %v400
    %v679 = vunpack.c.h.b16 %v400
    %v680 = vunpack.c.l.b16 %v401
    %v681 = vunpack.c.l.b16 %v402
    %v682 = vunpack.c.h.b16 %v402
    %v683 = vunpack.c.l.b16 %v403
    %v684 = vunpack.c.l.b16 %v404
    %v685 = vunpack.c.h.b16 %v404
    %v686 = vunpack.c.l.b16 %v405
    %v687 = vunpack.c.l.b16 %v406
    %v688 = vunpack.c.h.b16 %v406
    %v689 = vunpack.c.l.b16 %v407
    %v690 = vunpack.c.l.b16 %v408
    %v691 = vunpack.c.h.b16 %v408
    %v692 = vunpack.c.l.b16 %v409
    %v693 = vunpack.c.l.b16 %v410
    %v694 = vunpack.c.h.b16 %v410
    %v695 = vunpack.c.l.b16 %v411
    %v696 = vunpack.c.l.b16 %v412
    %v697 = vunpack.c.h.b16 %v412
    %v698 = vunpack.c.l.b16 %v413
    %v699 = vunpack.c.l.b16 %v414
    %v700 = vunpack.c.h.b16 %v414
    %v701 = vunpack.c.l.b16 %v415
    %v702 = vunpack.c.l.b16 %v416
    %v703 = vunpack.c.h.b16 %v416
    %v704 = vunpack.c.l.b16 %v417
    %v705 = vunpack.c.l.b16 %v418
    %v706 = vunpack.c.h.b16 %v418
    %v707 = vunpack.c.l.b16 %v419
    %v708 = vunpack.c.l.b16 %v420
    %v709 = vunpack.c.h.b16 %v420
    %v710 = vunpack.c.l.b16 %v421
    %v711 = vunpack.c.l.b16 %v422
    %v712 = vunpack.c.h.b16 %v422
    %v713 = vunpack.c.l.b16 %v423
    %v714 = vunpack.c.l.b16 %v424
    %v715 = vunpack.c.h.b16 %v424
    %v716 = vunpack.c.l.b16 %v425
    %v717 = vunpack.c.l.b16 %v426
    %v718 = vunpack.c.h.b16 %v426
    %v719 = vunpack.c.l.b16 %v427
    %v720 = vunpack.c.l.b16 %v428
    %v721 = vunpack.c.h.b16 %v428
    %v722 = vunpack.c.l.b16 %v429
    %v723 = vunpack.c.l.b16 %v430
    %v724 = vunpack.c.h.b16 %v430
    %v725 = vunpack.c.l.b16 %v431
    %v726 = vunpack.c.l.b16 %v432
    %v727 = vunpack.c.h.b16 %v432
    %v728 = vunpack.c.l.b16 %v433
    %v729 = vunpack.c.l.b16 %v434
    %v730 = vunpack.c.h.b16 %v434
    %v731 = vunpack.c.l.b16 %v435
    %v732 = vunpack.c.l.b16 %v436
    %v733 = vunpack.c.h.b16 %v436
    %v734 = vunpack.c.l.b16 %v437
    %v735 = vunpack.c.l.b16 %v438
    %v736 = vunpack.c.h.b16 %v438
    %v737 = vunpack.c.l.b16 %v439
    %v738 = vunpack.c.l.b16 %v440
    %v739 = vunpack.c.h.b16 %v440
    %v740 = vunpack.c.l.b16 %v441
    %v741 = vunpack.c.l.b16 %v442
    %v742 = vunpack.c.h.b16 %v442
    %v743 = vunpack.c.l.b16 %v443
    %v744 = vunpack.c.l.b16 %v444
    %v745 = vunpack.c.h.b16 %v444
    %v746 = vunpack.c.l.b16 %v445
    %v747 = vunpack.c.l.b16 %v446
    %v748 = vunpack.c.h.b16 %v446
    %v749 = vunpack.c.l.b16 %v447
    %v750 = vunpack.c.l.b16 %v448
    %v751 = vunpack.c.h.b16 %v448
    %v752 = vunpack.c.l.b16 %v449
    %v753 = vunpack.c.l.b16 %v450
    %v754 = vunpack.c.h.b16 %v450
    %v755 = vunpack.c.l.b16 %v451
    %v756 = vunpack.c.l.b16 %v452
    %v757 = vunpack.c.h.b16 %v452
    %v758 = vunpack.c.l.b16 %v453
    %v759 = vunpack.c.l.b16 %v454
    %v760 = vunpack.c.h.b16 %v454
    %v761 = vunpack.c.l.b16 %v455
    %v762 = vunpack.c.l.b16 %v456
    %v763 = vunpack.c.h.b16 %v456
    %v764 = vunpack.c.l.b16 %v457
    %v765 = vunpack.c.l.b16 %v458
    %v766 = vunpack.c.h.b16 %v458
    %v767 = vunpack.c.l.b16 %v459
    %v768 = vunpack.c.l.b16 %v460
    %v769 = vunpack.c.h.b16 %v460
    %v770 = vunpack.c.l.b16 %v461
    %v771 = vunpack.c.l.b16 %v462
    %v772 = vunpack.c.h.b16 %v462
    %v773 = vunpack.c.l.b16 %v463
    %v774 = vunpack.c.l.b16 %v464
    %v775 = vunpack.c.h.b16 %v464
    %v776 = vunpack.c.l.b16 %v465
    %v777 = vunpack.c.l.b16 %v466
    %v778 = vunpack.c.h.b16 %v466
    %v779 = vunpack.c.l.b16 %v467
    %v780 = vunpack.c.l.b16 %v468
    %v781 = vunpack.c.h.b16 %v468
    %v782 = vunpack.c.l.b16 %v469
    %v783 = vunpack.c.l.b16 %v470
    %v784 = vunpack.c.h.b16 %v470
    %v785 = vunpack.c.l.b16 %v471
    %v786 = vunpack.c.l.b16 %v472
    %v787 = vunpack.c.h.b16 %v472
    %v788 = vunpack.c.l.b16 %v473
    %v789 = vunpack.c.l.b16 %v474
    %v790 = vunpack.c.h.b16 %v474
    %v791 = vunpack.c.l.b16 %v475
    %v792 = vunpack.c.l.b16 %v476
    %v793 = vunpack.c.h.b16 %v476
    %v794 = vunpack.c.l.b16 %v477
    %v795 = vunpack.c.l.b16 %v478
    %v796 = vunpack.c.h.b16 %v478
    %v797 = vunpack.c.l.b16 %v479
    %v798 = vunpack.c.l.b16 %v480
    %v799 = vunpack.c.h.b16 %v480
    %v800 = vunpack.c.l.b16 %v481
    %v801 = vunpack.c.l.b16 %v482
    %v802 = vunpack.c.h.b16 %v482
    %v803 = vunpack.c.l.b16 %v483
    %v804 = vunpack.c.l.b16 %v484
    %v805 = vunpack.c.h.b16 %v484
    %v806 = vunpack.c.l.b16 %v485
    %v807 = vunpack.c.l.b16 %v486
    %v808 = vunpack.c.h.b16 %v486
    %v809 = vunpack.c.l.b16 %v487
    %v810 = vunpack.c.l.b16 %v488
    %v811 = vunpack.c.h.b16 %v488
    %v812 = vunpack.c.l.b16 %v489
    %v813 = vunpack.c.l.b16 %v490
    %v814 = vunpack.c.h.b16 %v490
    %v815 = vunpack.c.l.b16 %v491
    %v816 = vunpack.c.l.b16 %v492
    %v817 = vunpack.c.h.b16 %v492
    %v818 = vunpack.c.l.b16 %v493
    %v819 = vunpack.c.l.b16 %v494
    %v820 = vunpack.c.h.b16 %v494
    %v821 = vunpack.c.l.b16 %v495
    %v822 = vunpack.c.l.b16 %v496
    %v823 = vunpack.c.h.b16 %v496
    %v824 = vunpack.c.l.b16 %v497
    %v825 = vunpack.c.l.b16 %v498
    %v826 = vunpack.c.h.b16 %v498
    %v827 = vunpack.c.l.b16 %v499
    %v828 = vunpack.c.l.b16 %v500
    %v829 = vunpack.c.h.b16 %v500
    %v830 = vunpack.c.l.b16 %v501
    %v831 = vunpack.c.l.b16 %v502
    %v832 = vunpack.c.h.b16 %v502
    %v833 = vunpack.c.l.b16 %v503
    %v834 = vunpack.c.l.b16 %v504
    %v835 = vunpack.c.h.b16 %v504
    %v836 = vunpack.c.l.b16 %v505
    %v837 = vunpack.c.l.b16 %v506
    %v838 = vunpack.c.h.b16 %v506
    %v839 = vunpack.c.l.b16 %v507
    %v840 = vunpack.c.l.b16 %v508
    %v841 = vunpack.c.h.b16 %v508
    %v842 = vunpack.c.l.b16 %v509
    %v843 = vunpack.c.l.b16 %v510
    %v844 = vunpack.c.h.b16 %v510
    %v845 = vunpack.c.l.b16 %v511
    %v846 = vunpack.c.l.b16 %v512
    %v847 = vunpack.c.h.b16 %v512
    %v848 = vunpack.c.l.b16 %v513
    %v849 = vunpack.c.l.b16 %v514
    %v850 = vunpack.c.h.b16 %v514
    %v851 = vunpack.c.l.b16 %v515
    %v852 = vunpack.c.l.b16 %v516
    %v853 = vunpack.c.h.b16 %v516
    %v854 = vunpack.c.l.b16 %v517
    %v855 = vpack.c.b16 %v666, %v663
    %v856 = vpack.c.b16 %v667, %v664
    %v857 = vpack.c.b16 %v668, %v665
    %v858 = vpack.c.b16 %v672, %v669
    %v859 = vpack.c.b16 %v673, %v670
    %v860 = vpack.c.b16 %v674, %v671
    %v861 = vpack.c.b16 %v678, %v675
    %v862 = vpack.c.b16 %v679, %v676
    %v863 = vpack.c.b16 %v680, %v677
    %v864 = vpack.c.b16 %v684, %v681
    %v865 = vpack.c.b16 %v685, %v682
    %v866 = vpack.c.b16 %v686, %v683
    %v867 = vpack.c.b16 %v690, %v687
    %v868 = vpack.c.b16 %v691, %v688
    %v869 = vpack.c.b16 %v692, %v689
    %v870 = vpack.c.b16 %v696, %v693
    %v871 = vpack.c.b16 %v697, %v694
    %v872 = vpack.c.b16 %v698, %v695
    %v873 = vpack.c.b16 %v702, %v699
    %v874 = vpack.c.b16 %v703, %v700
    %v875 = vpack.c.b16 %v704, %v701
    %v876 = vpack.c.b16 %v708, %v705
    %v877 = vpack.c.b16 %v709, %v706
    %v878 = vpack.c.b16 %v710, %v707
    %v879 = vpack.c.b16 %v714, %v711
    %v880 = vpack.c.b16 %v715, %v712
    %v881 = vpack.c.b16 %v716, %v713
    %v882 = vpack.c.b16 %v720, %v717
    %v883 = vpack.c.b16 %v721, %v718
    %v884 = vpack.c.b16 %v722, %v719
    %v885 = vpack.c.b16 %v726, %v723
    %v886 = vpack.c.b16 %v727, %v724
    %v887 = vpack.c.b16 %v728, %v725
    %v888 = vpack.c.b16 %v732, %v729
    %v889 = vpack.c.b16 %v733, %v730
    %v890 = vpack.c.b16 %v734, %v731
    %v891 = vpack.c.b16 %v738, %v735
    %v892 = vpack.c.b16 %v739, %v736
    %v893 = vpack.c.b16 %v740, %v737
    %v894 = vpack.c.b16 %v744, %v741
    %v895 = vpack.c.b16 %v745, %v742
    %v896 = vpack.c.b16 %v746, %v743
    %v897 = vpack.c.b16 %v750, %v747
    %v898 = vpack.c.b16 %v751, %v748
    %v899 = vpack.c.b16 %v752, %v749
    %v900 = vpack.c.b16 %v756, %v753
    %v901 = vpack.c.b16 %v757, %v754
    %v902 = vpack.c.b16 %v758, %v755
    %v903 = vpack.c.b16 %v762, %v759
    %v904 = vpack.c.b16 %v763, %v760
    %v905 = vpack.c.b16 %v764, %v761
    %v906 = vpack.c.b16 %v768, %v765
    %v907 = vpack.c.b16 %v769, %v766
    %v908 = vpack.c.b16 %v770, %v767
    %v909 = vpack.c.b16 %v774, %v771
    %v910 = vpack.c.b16 %v775, %v772
    %v911 = vpack.c.b16 %v776, %v773
    %v912 = vpack.c.b16 %v780, %v777
    %v913 = vpack.c.b16 %v781, %v778
    %v914 = vpack.c.b16 %v782, %v779
    %v915 = vpack.c.b16 %v786, %v783
    %v916 = vpack.c.b16 %v787, %v784
    %v917 = vpack.c.b16 %v788, %v785
    %v918 = vpack.c.b16 %v792, %v789
    %v919 = vpack.c.b16 %v793, %v790
    %v920 = vpack.c.b16 %v794, %v791
    %v921 = vpack.c.b16 %v798, %v795
    %v922 = vpack.c.b16 %v799, %v796
    %v923 = vpack.c.b16 %v800, %v797
    %v924 = vpack.c.b16 %v804, %v801
    %v925 = vpack.c.b16 %v805, %v802
    %v926 = vpack.c.b16 %v806, %v803
    %v927 = vpack.c.b16 %v810, %v807
    %v928 = vpack.c.b16 %v811, %v808
    %v929 = vpack.c.b16 %v812, %v809
    %v930 = vpack.c.b16 %v816, %v813
    %v931 = vpack.c.b16 %v817, %v814
    %v932 = vpack.c.b16 %v818, %v815
    %v933 = vpack.c.b16 %v822, %v819
    %v934 = vpack.c.b16 %v823, %v820
    %v935 = vpack.c.b16 %v824, %v821
    %v936 = vpack.c.b16 %v828, %v825
    %v937 = vpack.c.b16 %v829, %v826
    %v938 = vpack.c.b16 %v830, %v827
    %v939 = vpack.c.b16 %v834, %v831
    %v940 = vpack.c.b16 %v835, %v832
    %v941 = vpack.c.b16 %v836, %v833
    %v942 = vpack.c.b16 %v840, %v837
    %v943 = vpack.c.b16 %v841, %v838
    %v944 = vpack.c.b16 %v842, %v839
    %v945 = vpack.c.b16 %v846, %v843
    %v946 = vpack.c.b16 %v847, %v844
    %v947 = vpack.c.b16 %v848, %v845
    %v948 = vpack.c.b16 %v852, %v849
    %v949 = vpack.c.b16 %v853, %v850
    %v950 = vpack.c.b16 %v854, %v851
    %1047 = vmatprep.subr.bf16.mxu0 %v856
    %1048 = vmatpush1.bf16.msra.mxu0 %v855
    %1049 = vmatprep.subr.bf16.mxu0 %v859
    %1050 = vmatpush1.bf16.msra.mxu0 %v858
    %1051 = vmatprep.subr.bf16.mxu0 %v862
    %1052 = vmatpush1.bf16.msra.mxu0 %v861
    %1053 = vmatprep.subr.bf16.mxu0 %v865
    %1054 = vmatpush1.bf16.msra.mxu0 %v864
    %1055 = vmatprep.subr.bf16.mxu0 %v868
    %1056 = vmatpush1.bf16.msra.mxu0 %v867
    %1057 = vmatprep.subr.bf16.mxu0 %v871
    %1058 = vmatpush1.bf16.msra.mxu0 %v870
    %1059 = vmatprep.subr.bf16.mxu0 %v874
    %1060 = vmatpush1.bf16.msra.mxu0 %v873
    %1061 = vmatprep.subr.bf16.mxu0 %v877
    %1062 = vmatpush1.bf16.msra.mxu0 %v876
    %1063 = vmatprep.subr.bf16.mxu0 %v880
    %1064 = vmatpush1.bf16.msra.mxu0 %v879
    %1065 = vmatprep.subr.bf16.mxu0 %v883
    %1066 = vmatpush1.bf16.msra.mxu0 %v882
    %1067 = vmatprep.subr.bf16.mxu0 %v886
    %1068 = vmatpush1.bf16.msra.mxu0 %v885
    %1069 = vmatprep.subr.bf16.mxu0 %v889
    %1070 = vmatpush1.bf16.msra.mxu0 %v888
    %1071 = vmatprep.subr.bf16.mxu0 %v892
    %1072 = vmatpush1.bf16.msra.mxu0 %v891
    %1073 = vmatprep.subr.bf16.mxu0 %v895
    %1074 = vmatpush1.bf16.msra.mxu0 %v894
    %1075 = vmatprep.subr.bf16.mxu0 %v898
    %1076 = vmatpush1.bf16.msra.mxu0 %v897
    %1077 = vmatprep.subr.bf16.mxu0 %v901
    %1078 = vmatpush1.bf16.msra.mxu0 %v900
    %1079 = vmatprep.mubr.bf16.mxu0 %v387
    %1080 = vmatmul.mubr.bf16.gmra.mrb[0].mxu0 %v386
    %v1081 = vpop.f32.mrb[0].mxu0
    %v1082 = vadd.f32 %v523, %v1081
    %v1083 = vpop.f32.mrb[0].mxu0
    %v1084 = vadd.f32 %v527, %v1083
    %v1085 = vpop.f32.mrb[0].mxu0
    %v1086 = vpop.f32.mrb[0].mxu0
    %1087 = vdwg.mxu0
    %1088 = vmatprep.subr.bf16.mxu0 %v904
    %1089 = vmatpush1.bf16.msra.mxu0 %v903
    %1090 = vmatprep.subr.bf16.mxu0 %v907
    %1091 = vmatpush1.bf16.msra.mxu0 %v906
    %1092 = vmatprep.subr.bf16.mxu0 %v910
    %1093 = vmatpush1.bf16.msra.mxu0 %v909
    %1094 = vmatprep.subr.bf16.mxu0 %v913
    %1095 = vmatpush1.bf16.msra.mxu0 %v912
    %1096 = vmatprep.subr.bf16.mxu0 %v916
    %1097 = vmatpush1.bf16.msra.mxu0 %v915
    %1098 = vmatprep.subr.bf16.mxu0 %v919
    %1099 = vmatpush1.bf16.msra.mxu0 %v918
    %1100 = vmatprep.subr.bf16.mxu0 %v922
    %1101 = vmatpush1.bf16.msra.mxu0 %v921
    %1102 = vmatprep.subr.bf16.mxu0 %v925
    %1103 = vmatpush1.bf16.msra.mxu0 %v924
    %1104 = vmatprep.subr.bf16.mxu0 %v928
    %1105 = vmatpush1.bf16.msra.mxu0 %v927
    %1106 = vmatprep.subr.bf16.mxu0 %v931
    %1107 = vmatpush1.bf16.msra.mxu0 %v930
    %1108 = vmatprep.subr.bf16.mxu0 %v934
    %1109 = vmatpush1.bf16.msra.mxu0 %v933
    %1110 = vmatprep.subr.bf16.mxu0 %v937
    %1111 = vmatpush1.bf16.msra.mxu0 %v936
    %1112 = vmatprep.subr.bf16.mxu0 %v940
    %1113 = vmatpush1.bf16.msra.mxu0 %v939
    %1114 = vmatprep.subr.bf16.mxu0 %v943
    %1115 = vmatpush1.bf16.msra.mxu0 %v942
    %1116 = vmatprep.subr.bf16.mxu0 %v946
    %1117 = vmatpush1.bf16.msra.mxu0 %v945
    %1118 = vmatprep.subr.bf16.mxu0 %v949
    %1119 = vmatpush1.bf16.msra.mxu0 %v948
    %1120 = vmatprep.mubr.bf16.mxu0 %v389
    %1121 = vmatmul.mubr.bf16.gmra.mrb[0].mxu0 %v388
    %v1122 = vpop.f32.mrb[0].mxu0
    %v1123 = vadd.f32 %v1082, %v1122
    %v1124 = vpop.f32.mrb[0].mxu0
    %v1125 = vadd.f32 %v1084, %v1124
    %v1126 = vpop.f32.mrb[0].mxu0
    %v1127 = vpop.f32.mrb[0].mxu0
    %1128 = vdwg.mxu0
    %1129 = vmatprep.subr.bf16.mxu0 0
    %1130 = vmatpush1.bf16.msra.mxu0 %v857
    %1131 = vmatprep.subr.bf16.mxu0 0
    %1132 = vmatpush1.bf16.msra.mxu0 %v860
    %1133 = vmatprep.subr.bf16.mxu0 0
    %1134 = vmatpush1.bf16.msra.mxu0 %v863
    %1135 = vmatprep.subr.bf16.mxu0 0
    %1136 = vmatpush1.bf16.msra.mxu0 %v866
    %1137 = vmatprep.subr.bf16.mxu0 0
    %1138 = vmatpush1.bf16.msra.mxu0 %v869
    %1139 = vmatprep.subr.bf16.mxu0 0
    %1140 = vmatpush1.bf16.msra.mxu0 %v872
    %1141 = vmatprep.subr.bf16.mxu0 0
    %1142 = vmatpush1.bf16.msra.mxu0 %v875
    %1143 = vmatprep.subr.bf16.mxu0 0
    %1144 = vmatpush1.bf16.msra.mxu0 %v878
    %1145 = vmatprep.subr.bf16.mxu0 0
    %1146 = vmatpush1.bf16.msra.mxu0 %v881
    %1147 = vmatprep.subr.bf16.mxu0 0
    %1148 = vmatpush1.bf16.msra.mxu0 %v884
    %1149 = vmatprep.subr.bf16.mxu0 0
    %1150 = vmatpush1.bf16.msra.mxu0 %v887
    %1151 = vmatprep.subr.bf16.mxu0 0
    %1152 = vmatpush1.bf16.msra.mxu0 %v890
    %1153 = vmatprep.subr.bf16.mxu0 0
    %1154 = vmatpush1.bf16.msra.mxu0 %v893
    %1155 = vmatprep.subr.bf16.mxu0 0
    %1156 = vmatpush1.bf16.msra.mxu0 %v896
    %1157 = vmatprep.subr.bf16.mxu0 0
    %1158 = vmatpush1.bf16.msra.mxu0 %v899
    %1159 = vmatprep.subr.bf16.mxu0 0
    %1160 = vmatpush1.bf16.msra.mxu0 %v902
    %1161 = vmatprep.mubr.bf16.mxu0 %v387
    %1162 = vmatmul.mubr.bf16.gmra.mrb[0].mxu0 %v386
    %v1163 = vpop.f32.mrb[0].mxu0
    %v1164 = vadd.f32 %v531, %v1163
    %v1165 = vpop.f32.mrb[0].mxu0
    %v1166 = vpop.f32.mrb[0].mxu0
    %v1167 = vpop.f32.mrb[0].mxu0
    %1168 = vdwg.mxu0
    %1169 = vmatprep.subr.bf16.mxu0 0
    %1170 = vmatpush1.bf16.msra.mxu0 %v905
    %1171 = vmatprep.subr.bf16.mxu0 0
    %1172 = vmatpush1.bf16.msra.mxu0 %v908
    %1173 = vmatprep.subr.bf16.mxu0 0
    %1174 = vmatpush1.bf16.msra.mxu0 %v911
    %1175 = vmatprep.subr.bf16.mxu0 0
    %1176 = vmatpush1.bf16.msra.mxu0 %v914
    %1177 = vmatprep.subr.bf16.mxu0 0
    %1178 = vmatpush1.bf16.msra.mxu0 %v917
    %1179 = vmatprep.subr.bf16.mxu0 0
    %1180 = vmatpush1.bf16.msra.mxu0 %v920
    %1181 = vmatprep.subr.bf16.mxu0 0
    %1182 = vmatpush1.bf16.msra.mxu0 %v923
    %1183 = vmatprep.subr.bf16.mxu0 0
    %1184 = vmatpush1.bf16.msra.mxu0 %v926
    %1185 = vmatprep.subr.bf16.mxu0 0
    %1186 = vmatpush1.bf16.msra.mxu0 %v929
    %1187 = vmatprep.subr.bf16.mxu0 0
    %1188 = vmatpush1.bf16.msra.mxu0 %v932
    %1189 = vmatprep.subr.bf16.mxu0 0
    %1190 = vmatpush1.bf16.msra.mxu0 %v935
    %1191 = vmatprep.subr.bf16.mxu0 0
    %1192 = vmatpush1.bf16.msra.mxu0 %v938
    %1193 = vmatprep.subr.bf16.mxu0 0
    %1194 = vmatpush1.bf16.msra.mxu0 %v941
    %1195 = vmatprep.subr.bf16.mxu0 0
    %1196 = vmatpush1.bf16.msra.mxu0 %v944
    %1197 = vmatprep.subr.bf16.mxu0 0
    %1198 = vmatpush1.bf16.msra.mxu0 %v947
    %1199 = vmatprep.subr.bf16.mxu0 0
    %1200 = vmatpush1.bf16.msra.mxu0 %v950
    %1201 = vmatprep.mubr.bf16.mxu0 %v389
    %1202 = vmatmul.mubr.bf16.gmra.mrb[0].mxu0 %v388
    %v1203 = vpop.f32.mrb[0].mxu0
    %v1204 = vadd.f32 %v1164, %v1203
    %v1205 = vpop.f32.mrb[0].mxu0
    %v1206 = vpop.f32.mrb[0].mxu0
    %v1207 = vpop.f32.mrb[0].mxu0
    %1208 = vdwg.mxu0
    %v1209 = vmax.f32 %v1123, 0.0
    %v1210 = vmax.f32 %v1125, 0.0
    %v1211 = vmax.f32 %v1204, 0.0
    %v1212 = vpack.c.bf16 %v1209, %v1209
    %v1213 = vpack.c.bf16 %v1210, %v1210
    %v1214 = vpack.c.bf16 %v1211, %v1211
    %v1215 = vld [vmem:[#allocation9] sm:$0xf]
    %v1216 = vld [vmem:[#allocation9 + $0x4] sm:$0xf]
    %v1217 = vld [vmem:[#allocation9 + $0x8] sm:$0xf]
    %v1218 = vld [vmem:[#allocation9 + $0xc] sm:$0xf]
    %v1219 = vld [vmem:[#allocation9 + $0x10] sm:$0xf]
    %v1220 = vld [vmem:[#allocation9 + $0x14] sm:$0xf]
    %v1221 = vld [vmem:[#allocation9 + $0x18] sm:$0xf]
    %v1222 = vld [vmem:[#allocation9 + $0x1c] sm:$0xf]
    %v1223 = vld [vmem:[#allocation9 + $0x20] sm:$0xf]
    %v1224 = vld [vmem:[#allocation9 + $0x24] sm:$0xf]
    %v1225 = vld [vmem:[#allocation9 + $0x28] sm:$0xf]
    %v1226 = vld [vmem:[#allocation9 + $0x2c] sm:$0xf]
    %v1227 = vld [vmem:[#allocation9 + $0x30] sm:$0xf]
    %v1228 = vld [vmem:[#allocation9 + $0x34] sm:$0xf]
    %v1229 = vld [vmem:[#allocation9 + $0x38] sm:$0xf]
    %v1230 = vld [vmem:[#allocation9 + $0x3c] sm:$0xf]
    %v1231 = vld [vmem:[#allocation9 + $0x40] sm:$0xf]
    %v1232 = vld [vmem:[#allocation9 + $0x44] sm:$0xf]
    %v1233 = vld [vmem:[#allocation9 + $0x48] sm:$0xf]
    %v1234 = vld [vmem:[#allocation9 + $0x4c] sm:$0xf]
    %v1235 = vld [vmem:[#allocation9 + $0x50] sm:$0xf]
    %v1236 = vld [vmem:[#allocation9 + $0x54] sm:$0xf]
    %v1237 = vld [vmem:[#allocation9 + $0x58] sm:$0xf]
    %v1238 = vld [vmem:[#allocation9 + $0x5c] sm:$0xf]
    %v1239 = vld [vmem:[#allocation9 + $0x60] sm:$0xf]
    %v1240 = vld [vmem:[#allocation9 + $0x64] sm:$0xf]
    %v1241 = vld [vmem:[#allocation9 + $0x68] sm:$0xf]
    %v1242 = vld [vmem:[#allocation9 + $0x6c] sm:$0xf]
    %v1243 = vld [vmem:[#allocation9 + $0x70] sm:$0xf]
    %v1244 = vld [vmem:[#allocation9 + $0x74] sm:$0xf]
    %v1245 = vld [vmem:[#allocation9 + $0x78] sm:$0xf]
    %v1246 = vld [vmem:[#allocation9 + $0x7c] sm:$0xf]
    %v1247 = vld [vmem:[#allocation9 + $0x80] sm:$0xf]
    %v1248 = vld [vmem:[#allocation9 + $0x84] sm:$0xf]
    %v1249 = vld [vmem:[#allocation9 + $0x88] sm:$0xf]
    %v1250 = vld [vmem:[#allocation9 + $0x8c] sm:$0xf]
    %v1251 = vld [vmem:[#allocation9 + $0x90] sm:$0xf]
    %v1252 = vld [vmem:[#allocation9 + $0x94] sm:$0xf]
    %v1253 = vld [vmem:[#allocation9 + $0x98] sm:$0xf]
    %v1254 = vld [vmem:[#allocation9 + $0x9c] sm:$0xf]
    %v1255 = vld [vmem:[#allocation9 + $0xa0] sm:$0xf]
    %v1256 = vld [vmem:[#allocation9 + $0xa4] sm:$0xf]
    %v1257 = vld [vmem:[#allocation9 + $0xa8] sm:$0xf]
    %v1258 = vld [vmem:[#allocation9 + $0xac] sm:$0xf]
    %v1259 = vld [vmem:[#allocation9 + $0xb0] sm:$0xf]
    %v1260 = vld [vmem:[#allocation9 + $0xb4] sm:$0xf]
    %v1261 = vld [vmem:[#allocation9 + $0xb8] sm:$0xf]
    %v1262 = vld [vmem:[#allocation9 + $0xbc] sm:$0xf]
    %v1263 = vld [vmem:[%s6] sm:$0x1]
    %v1265 = vlaneseq
    %v1266 = vshrl.u32 %v1265, 7
    %v1267 = vsub.s32 0, %v1266
    %v1268 = vrot.slane %v1263, %v1267
    %v1318 = vunpack.c.l.b16 %v1215
    %v1319 = vunpack.c.l.b16 %v1216
    %v1320 = vunpack.c.l.b16 %v1217
    %v1321 = vunpack.c.l.b16 %v1218
    %v1322 = vunpack.c.l.b16 %v1219
    %v1323 = vunpack.c.l.b16 %v1220
    %v1324 = vunpack.c.l.b16 %v1221
    %v1325 = vunpack.c.l.b16 %v1222
    %v1326 = vunpack.c.l.b16 %v1223
    %v1327 = vunpack.c.l.b16 %v1224
    %v1328 = vunpack.c.l.b16 %v1225
    %v1329 = vunpack.c.l.b16 %v1226
    %v1330 = vunpack.c.l.b16 %v1227
    %v1331 = vunpack.c.l.b16 %v1228
    %v1332 = vunpack.c.l.b16 %v1229
    %v1333 = vunpack.c.l.b16 %v1230
    %v1334 = vunpack.c.l.b16 %v1231
    %v1335 = vunpack.c.l.b16 %v1232
    %v1336 = vunpack.c.l.b16 %v1233
    %v1337 = vunpack.c.l.b16 %v1234
    %v1338 = vunpack.c.l.b16 %v1235
    %v1339 = vunpack.c.l.b16 %v1236
    %v1340 = vunpack.c.l.b16 %v1237
    %v1341 = vunpack.c.l.b16 %v1238
    %v1342 = vunpack.c.l.b16 %v1239
    %v1343 = vunpack.c.l.b16 %v1240
    %v1344 = vunpack.c.l.b16 %v1241
    %v1345 = vunpack.c.l.b16 %v1242
    %v1346 = vunpack.c.l.b16 %v1243
    %v1347 = vunpack.c.l.b16 %v1244
    %v1348 = vunpack.c.l.b16 %v1245
    %v1349 = vunpack.c.l.b16 %v1246
    %v1350 = vunpack.c.l.b16 %v1247
    %v1351 = vunpack.c.l.b16 %v1248
    %v1352 = vunpack.c.l.b16 %v1249
    %v1353 = vunpack.c.l.b16 %v1250
    %v1354 = vunpack.c.l.b16 %v1251
    %v1355 = vunpack.c.l.b16 %v1252
    %v1356 = vunpack.c.l.b16 %v1253
    %v1357 = vunpack.c.l.b16 %v1254
    %v1358 = vunpack.c.l.b16 %v1255
    %v1359 = vunpack.c.l.b16 %v1256
    %v1360 = vunpack.c.l.b16 %v1257
    %v1361 = vunpack.c.l.b16 %v1258
    %v1362 = vunpack.c.l.b16 %v1259
    %v1363 = vunpack.c.l.b16 %v1260
    %v1364 = vunpack.c.l.b16 %v1261
    %v1365 = vunpack.c.l.b16 %v1262
    %v1366 = vpack.c.b16 %v1319, %v1318
    %v1367 = vpack.c.b16 %v1321, %v1320
    %v1368 = vpack.c.b16 %v1323, %v1322
    %v1369 = vpack.c.b16 %v1325, %v1324
    %v1370 = vpack.c.b16 %v1327, %v1326
    %v1371 = vpack.c.b16 %v1329, %v1328
    %v1372 = vpack.c.b16 %v1331, %v1330
    %v1373 = vpack.c.b16 %v1333, %v1332
    %v1374 = vpack.c.b16 %v1335, %v1334
    %v1375 = vpack.c.b16 %v1337, %v1336
    %v1376 = vpack.c.b16 %v1339, %v1338
    %v1377 = vpack.c.b16 %v1341, %v1340
    %v1378 = vpack.c.b16 %v1343, %v1342
    %v1379 = vpack.c.b16 %v1345, %v1344
    %v1380 = vpack.c.b16 %v1347, %v1346
    %v1381 = vpack.c.b16 %v1349, %v1348
    %v1382 = vpack.c.b16 %v1351, %v1350
    %v1383 = vpack.c.b16 %v1353, %v1352
    %v1384 = vpack.c.b16 %v1355, %v1354
    %v1385 = vpack.c.b16 %v1357, %v1356
    %v1386 = vpack.c.b16 %v1359, %v1358
    %v1387 = vpack.c.b16 %v1361, %v1360
    %v1388 = vpack.c.b16 %v1363, %v1362
    %v1389 = vpack.c.b16 %v1365, %v1364
    %1414 = vmatprep.subr.bf16.mxu0 0
    %1415 = vmatpush1.bf16.msra.mxu0 %v1366
    %1416 = vmatprep.subr.bf16.mxu0 0
    %1417 = vmatpush1.bf16.msra.mxu0 %v1367
    %1418 = vmatprep.subr.bf16.mxu0 0
    %1419 = vmatpush1.bf16.msra.mxu0 %v1368
    %1420 = vmatprep.subr.bf16.mxu0 0
    %1421 = vmatpush1.bf16.msra.mxu0 %v1369
    %1422 = vmatprep.subr.bf16.mxu0 0
    %1423 = vmatpush1.bf16.msra.mxu0 %v1370
    %1424 = vmatprep.subr.bf16.mxu0 0
    %1425 = vmatpush1.bf16.msra.mxu0 %v1371
    %1426 = vmatprep.subr.bf16.mxu0 0
    %1427 = vmatpush1.bf16.msra.mxu0 %v1372
    %1428 = vmatprep.subr.bf16.mxu0 0
    %1429 = vmatpush1.bf16.msra.mxu0 %v1373
    %1430 = vmatprep.subr.bf16.mxu0 0
    %1431 = vmatpush1.bf16.msra.mxu0 %v1374
    %1432 = vmatprep.subr.bf16.mxu0 0
    %1433 = vmatpush1.bf16.msra.mxu0 %v1375
    %1434 = vmatprep.subr.bf16.mxu0 0
    %1435 = vmatpush1.bf16.msra.mxu0 %v1376
    %1436 = vmatprep.subr.bf16.mxu0 0
    %1437 = vmatpush1.bf16.msra.mxu0 %v1377
    %1438 = vmatprep.subr.bf16.mxu0 0
    %1439 = vmatpush1.bf16.msra.mxu0 %v1378
    %1440 = vmatprep.subr.bf16.mxu0 0
    %1441 = vmatpush1.bf16.msra.mxu0 %v1379
    %1442 = vmatprep.subr.bf16.mxu0 0
    %1443 = vmatpush1.bf16.msra.mxu0 %v1380
    %1444 = vmatprep.subr.bf16.mxu0 0
    %1445 = vmatpush1.bf16.msra.mxu0 %v1381
    %1446 = vmatprep.mubr.bf16.mxu0 %v1213
    %1447 = vmatmul.mubr.bf16.gmra.mrb[0].mxu0 %v1212
    %v1448 = vpop.f32.mrb[0].mxu0
    %v1449 = vadd.f32 %v1268, %v1448
    %v1450 = vpop.f32.mrb[0].mxu0
    %v1451 = vpop.f32.mrb[0].mxu0
    %v1452 = vpop.f32.mrb[0].mxu0
    %1453 = vdwg.mxu0
    %1454 = vmatprep.subr.bf16.mxu0 0
    %1455 = vmatpush1.bf16.msra.mxu0 %v1382
    %1456 = vmatprep.subr.bf16.mxu0 0
    %1457 = vmatpush1.bf16.msra.mxu0 %v1383
    %1458 = vmatprep.subr.bf16.mxu0 0
    %1459 = vmatpush1.bf16.msra.mxu0 %v1384
    %1460 = vmatprep.subr.bf16.mxu0 0
    %1461 = vmatpush1.bf16.msra.mxu0 %v1385
    %1462 = vmatprep.subr.bf16.mxu0 0
    %1463 = vmatpush1.bf16.msra.mxu0 %v1386
    %1464 = vmatprep.subr.bf16.mxu0 0
    %1465 = vmatpush1.bf16.msra.mxu0 %v1387
    %1466 = vmatprep.subr.bf16.mxu0 0
    %1467 = vmatpush1.bf16.msra.mxu0 %v1388
    %1468 = vmatprep.subr.bf16.mxu0 0
    %1469 = vmatpush1.bf16.msra.mxu0 %v1389
    %1470 = vmatprep.subr.bf16.mxu0 0
    %1471 = vmatpush1.bf16.msra.mxu0 0
    %1472 = vmatprep.subr.bf16.mxu0 0
    %1473 = vmatpush1.bf16.msra.mxu0 0
    %1474 = vmatprep.subr.bf16.mxu0 0
    %1475 = vmatpush1.bf16.msra.mxu0 0
    %1476 = vmatprep.subr.bf16.mxu0 0
    %1477 = vmatpush1.bf16.msra.mxu0 0
    %1478 = vmatprep.subr.bf16.mxu0 0
    %1479 = vmatpush1.bf16.msra.mxu0 0
    %1480 = vmatprep.subr.bf16.mxu0 0
    %1481 = vmatpush1.bf16.msra.mxu0 0
    %1482 = vmatprep.subr.bf16.mxu0 0
    %1483 = vmatpush1.bf16.msra.mxu0 0
    %1484 = vmatprep.subr.bf16.mxu0 0
    %1485 = vmatpush1.bf16.msra.mxu0 0
    %1486 = vmatprep.mubr.bf16.mxu0 0
    %1487 = vmatmul.mubr.bf16.gmra.mrb[0].mxu0 %v1214
    %v1488 = vpop.f32.mrb[0].mxu0
    %v1489 = vadd.f32 %v1449, %v1488
    %v1490 = vpop.f32.mrb[0].mxu0
    %v1491 = vpop.f32.mrb[0].mxu0
    %v1492 = vpop.f32.mrb[0].mxu0
    %1493 = vdwg.mxu0
    %v1494 = vtanh.pop %v1489
    %1495 = vst [vmem:[#allocation11] sm:$0xff] %v1494
    // Predicated region
    $region46: #{tpu_custom_call.1} parent=1 // pred_check
      _
    $region47: #{tpu_custom_call.1} parent=1 // pred_check_branch
      %1497 = sbr.rel (0) target = $region49
    $region48: #{tpu_custom_call.1} parent=1 // pred_region
      %s1499 = ssub.s32 128, 128
      %1500 = vsyncadd [#allocation5], %s1499
      %s1502 = sshll.u32 [#allocation11], 4
      %s1503 = int_to_ptr.vmem [resolvable:$true] %s1502
      %1505 = dma.vmem_to_hbm [thread:$0]  %s1503, 128, %s7, [#allocation5]
    $region49: #{tpu_custom_call.1} parent=1 // pred_fallthru
      _
    // Predicated region
    $region50: #{tpu_custom_call.1} parent=1 // pred_check
      _
    $region51: #{tpu_custom_call.1} parent=1 // pred_check_branch
      %1507 = sbr.rel (0) target = $region53
    $region52: #{tpu_custom_call.1} parent=1 // pred_region
      %1508 = dma.done [#allocation5], 128
    $region53: #{tpu_custom_call.1} parent=1 // pred_fallthru
      _
    %1509 = vsyncpa [#allocation4], 1
    %1510 = vsyncpa [#allocation7], 1
    %1511 = vsyncpa [#allocation10], 1
    %1512 = vsyncpa [#allocation5], 1

</llo_original>
